<compile_context>
chip_gen: v7x
topology: tpu7x:2x2x1
jax: 0.10.0
libtpu: 0.0.40
codegen_flags: <defaults>
</compile_context>

<pallas_src>
import functools

import jax
import jax.numpy as jnp
from jax.experimental import pallas as pl
from jax.experimental.pallas import tpu as pltpu

_EPS = 1e-8                      # torch F.cosine_similarity eps
_EPS_SQ = _EPS * _EPS            # max(sqrt(s), eps) == sqrt(max(s, eps^2))
_TARGET_BLOCK_BYTES = 4 * 1024 * 1024   # ~4 MiB per (tn, D) input block
_MAX_ROW_TILE = 32768


def _mse_kernel(x1_ref, x2_ref, out_ref, acc_ref, *, tn, tiles_per_part, n_rows):
    p = pl.program_id(0)
    i = pl.program_id(1)

    @pl.when(i == 0)
    def _():
        acc_ref[...] = jnp.zeros_like(acc_ref)

    # Mask rows past the end of the array (ragged last tile; overhanging tiles
    # of the last partition re-read the last valid block, see index_map, and
    # are fully masked here).
    start = (p * tiles_per_part + i) * tn
    row_ids = jax.lax.broadcasted_iota(jnp.int32, (tn, 1), 0)
    valid = (row_ids + start) < n_rows                         # (tn, 1)

    diff = x1_ref[...].astype(jnp.float32) - x2_ref[...].astype(jnp.float32)
    diff = jnp.where(valid, diff, 0.0)
    acc_ref[...] += diff * diff                                # pure VPU accumulate

    @pl.when(i == pl.num_programs(1) - 1)
    def _():
        partial = jnp.sum(acc_ref[...])                        # one reduce per partition
        out_ref[...] = jnp.full(out_ref.shape, partial, dtype=jnp.float32)


def _cosine_kernel(x1_ref, x2_ref, out_ref, acc_ref, *, tn, tiles_per_part, n_rows):
    p = pl.program_id(0)
    i = pl.program_id(1)

    @pl.when(i == 0)
    def _():
        acc_ref[...] = jnp.zeros_like(acc_ref)

    start = (p * tiles_per_part + i) * tn
    row_ids = jax.lax.broadcasted_iota(jnp.int32, (tn, 1), 0)
    valid = (row_ids + start) < n_rows                         # (tn, 1)

    f1 = x1_ref[...].astype(jnp.float32)
    f2 = x2_ref[...].astype(jnp.float32)
    dot = jnp.sum(f1 * f2, axis=-1, keepdims=True)             # (tn, 1)
    s1 = jnp.sum(f1 * f1, axis=-1, keepdims=True)
    s2 = jnp.sum(f2 * f2, axis=-1, keepdims=True)
    # max(sqrt(s), eps) == sqrt(max(s, eps^2)); rsqrt lowers to the EUP slot.
    # TODO(synk): torch clamps the *product* of norms; we clamp each norm —
    # only differs for rows whose norm is below 1e-8.
    cos = (dot
           * jax.lax.rsqrt(jnp.maximum(s1, _EPS_SQ))
           * jax.lax.rsqrt(jnp.maximum(s2, _EPS_SQ)))
    acc_ref[...] += jnp.where(valid, cos, 0.0)                 # (tn, 1)

    @pl.when(i == pl.num_programs(1) - 1)
    def _():
        partial = jnp.sum(acc_ref[...])
        out_ref[...] = jnp.full(out_ref.shape, partial, dtype=jnp.float32)


def feature_consistency_loss(features1, features2, loss_type="mse", *, _row_tile=None):
    """Pallas-accelerated FeatureConsistencyLoss.forward.

    Args:
      features1: (N, D) features from view 1.
      features2: (N, D) features from view 2.
      loss_type: 'mse' or 'cosine'.
      _row_tile: test-only override of the rows-per-tile choice (multiple of 8).

    Returns:
      scalar float32 loss.
    """
    if loss_type not in ("mse", "cosine"):
        raise ValueError(
            f"Unsupported loss_type for FeatureConsistencyLoss: {loss_type}")

    # Degenerate cases, same semantics as the PyTorch module.
    if features1.size == 0 or features2.size == 0:
        return jnp.float32(0.0)
    if features1.shape != features2.shape:
        # TODO(synk): PyTorch logs a warning here; logging has no Pallas equivalent.
        return jnp.float32(0.0)

    # Stream in the native dtype (f32/bf16/f16) and upcast in-vreg inside the
    # kernel; only non-float / wide inputs get a wrapper-side cast.
    dtype = jnp.promote_types(features1.dtype, features2.dtype)
    if not (jnp.issubdtype(dtype, jnp.floating) and jnp.dtype(dtype).itemsize <= 4):
        dtype = jnp.float32
    f1 = features1.astype(dtype)   # no-op when already in `dtype`
    f2 = features2.astype(dtype)

    n_rows, d = f1.shape
    itemsize = jnp.dtype(dtype).itemsize

    # D-aware row tile: ~4 MiB per (tn, D) input block, multiple of 8 sublanes;
    # small inputs use the full row extent (no divisibility requirement then).
    if _row_tile is not None:
        tn = int(_row_tile)
    else:
        tn = _TARGET_BLOCK_BYTES // max(1, d * itemsize)
        tn = max(8, min(_MAX_ROW_TILE, (tn // 8) * 8))
    if n_rows <= tn:
        tn = n_rows
    num_tiles = pl.cdiv(n_rows, tn)

    # Shard the row loop across both TensorCores on v7x (neutral on 1-TC chips).
    n_part = 2 if num_tiles >= 2 else 1
    tiles_per_part = pl.cdiv(num_tiles, n_part)
    last_block = num_tiles - 1

    def in_index_map(p, i):
        # Clamp so a (fully masked) overhanging tile of the last partition
        # never DMAs past the end of the array.
        return (jnp.minimum(p * tiles_per_part + i, last_block), 0)

    if loss_type == "mse":
        kernel = functools.partial(_mse_kernel, tn=tn,
                                   tiles_per_part=tiles_per_part, n_rows=n_rows)
        acc_shape = (tn, d)
        scale = 1.0 / float(n_rows * d)
    else:
        kernel = functools.partial(_cosine_kernel, tn=tn,
                                   tiles_per_part=tiles_per_part, n_rows=n_rows)
        acc_shape = (tn, 1)
        scale = 1.0 / float(n_rows)

    # Explicit scoped-VMEM budget: 2 inputs x 2 pipeline buffers + accumulator
    # + headroom, clamped well under v7x's 64 MiB physical VMEM.
    block_bytes = tn * d * itemsize
    acc_bytes = acc_shape[0] * acc_shape[1] * 4
    vmem_limit = min(48 * 1024 * 1024,
                     max(16 * 1024 * 1024, 4 * block_bytes + acc_bytes + (4 << 20)))

    out = pl.pallas_call(
        kernel,
        out_shape=jax.ShapeDtypeStruct((n_part, 8, 128), jnp.float32),
        grid_spec=pltpu.PrefetchScalarGridSpec(
            num_scalar_prefetch=0,
            grid=(n_part, tiles_per_part),
            in_specs=[pl.BlockSpec((tn, d), in_index_map),
                      pl.BlockSpec((tn, d), in_index_map)],
            out_specs=pl.BlockSpec((1, 8, 128), lambda p, i: (p, 0, 0)),
            scratch_shapes=[pltpu.VMEM(acc_shape, jnp.float32)],
        ),
        compiler_params=pltpu.CompilerParams(
            dimension_semantics=("parallel", "arbitrary"),
            vmem_limit_bytes=int(vmem_limit),
        ),
    )(f1, f2)

    total = jnp.sum(out[:, 0, 0]) * scale
    if loss_type == "cosine":
        return (1.0 - total).astype(jnp.float32)
    return total.astype(jnp.float32)


def _reference_loss(f1, f2, loss_type):
    # Pure-JAX reference of the PyTorch forward.
    f1 = f1.astype(jnp.float32)
    f2 = f2.astype(jnp.float32)
    if loss_type == "mse":
        return jnp.mean((f1 - f2) ** 2)
    dot = jnp.sum(f1 * f2, axis=-1)
    n1 = jnp.sqrt(jnp.sum(f1 * f1, axis=-1))
    n2 = jnp.sqrt(jnp.sum(f2 * f2, axis=-1))
    cos = dot / (jnp.maximum(n1, _EPS) * jnp.maximum(n2, _EPS))
    return 1.0 - jnp.mean(cos)


if __name__ == "__main__":
    key = jax.random.PRNGKey(0)
    N, D = 8, 32
    k1, k2 = jax.random.split(key)
    features1 = jax.random.normal(k1, (N, D), dtype=jnp.float32)
    features2 = features1 + 0.1 * jax.random.normal(k2, (N, D), dtype=jnp.float32)

    # Small single-tile path.
    for lt in ("mse", "cosine"):
        loss = jax.block_until_ready(
            feature_consistency_loss(features1, features2, loss_type=lt))
        ref = _reference_loss(features1, features2, lt)
        assert jnp.allclose(loss, ref, atol=1e-5, rtol=1e-5), (lt, loss, ref)

    # Ragged last tile + 2-partition ("parallel") path, forced small row tile.
    N2 = 20
    g1 = jax.random.normal(jax.random.PRNGKey(1), (N2, D), dtype=jnp.float32)
    g2 = jax.random.normal(jax.random.PRNGKey(2), (N2, D), dtype=jnp.float32)
    for lt in ("mse", "cosine"):
        loss = jax.block_until_ready(
            feature_consistency_loss(g1, g2, loss_type=lt, _row_tile=8))
        ref = _reference_loss(g1, g2, lt)
        assert jnp.allclose(loss, ref, atol=1e-5, rtol=1e-5), (lt, loss, ref)

    # bf16 inputs stream in native dtype and are cast to f32 in-kernel.
    b1 = features1.astype(jnp.bfloat16)
    b2 = features2.astype(jnp.bfloat16)
    for lt in ("mse", "cosine"):
        loss = jax.block_until_ready(
            feature_consistency_loss(b1, b2, loss_type=lt))
        ref = _reference_loss(b1, b2, lt)
        assert jnp.allclose(loss, ref, atol=1e-4, rtol=1e-4), (lt, loss, ref)

    # Degenerate paths (wrapper-level, no kernel launch).
    assert feature_consistency_loss(jnp.zeros((0, D)), jnp.zeros((0, D))) == 0.0
    assert feature_consistency_loss(features1, features1[:, : D // 2]) == 0.0

    print("KERNEL_OK")
</pallas_src>

<mosaic_0001>
module attributes {stable_mosaic.version = 11 : i64} {
  func.func @_mse_kernel(%arg0: i32, %arg1: i32, %arg2: memref<8x32xf32, #tpu.memory_space<vmem>>, %arg3: memref<8x32xf32, #tpu.memory_space<vmem>>, %arg4: memref<1x8x128xf32, #tpu.memory_space<vmem>>, %arg5: memref<8x32xf32, #tpu.memory_space<vmem>>) attributes {dimension_semantics = [#tpu.dimension_semantics<parallel>, #tpu.dimension_semantics<arbitrary>], iteration_bounds = array<i64: 1, 1>, scalar_prefetch = 0 : i64, scratch_operands = 1 : i64, tpu.core_type = #tpu.core_type<tc>, window_params = [{transform_indices = @transform_0, window_bounds = array<i64: 8, 32>}, {transform_indices = @transform_1, window_bounds = array<i64: 8, 32>}, {transform_indices = @transform_2, window_bounds = array<i64: 1, 8, 128>}]} {
    %c0_i32 = arith.constant 0 : i32
    %0 = arith.cmpi eq, %arg1, %c0_i32 : i32
    %1 = arith.extui %0 : i1 to i32
    %c0_i32_0 = arith.constant 0 : i32
    %2 = arith.cmpi ne, %1, %c0_i32_0 : i32
    scf.if %2 {
      %cst_11 = arith.constant 0.000000e+00 : f32
      %25 = vector.broadcast %cst_11 : f32 to vector<8x32xf32>
      %c0_12 = arith.constant 0 : index
      %c0_13 = arith.constant 0 : index
      %26 = vector.load %arg5[%c0_12, %c0_13] : memref<8x32xf32, #tpu.memory_space<vmem>>, vector<8x32xf32>
      tpu.vector_store %arg5[%c0_12, %c0_13], %25 {strides = array<i32>} : memref<8x32xf32, #tpu.memory_space<vmem>>, vector<8x32xf32>,
    } else {
    }
    %c1_i32 = arith.constant 1 : i32
    %3 = arith.muli %arg0, %c1_i32 : i32
    %4 = arith.addi %3, %arg1 : i32
    %c8_i32 = arith.constant 8 : i32
    %5 = arith.muli %4, %c8_i32 : i32
    %6 = tpu.iota {dimensions = array<i32: 0>} : vector<8x1xi32>
    %7 = vector.broadcast %5 : i32 to vector<8x1xi32>
    %8 = arith.addi %6, %7 : vector<8x1xi32>
    %c8_i32_1 = arith.constant 8 : i32
    %9 = vector.broadcast %c8_i32_1 : i32 to vector<8x1xi32>
    %10 = arith.cmpi slt, %8, %9 : vector<8x1xi32>
    %c0 = arith.constant 0 : index
    %c0_2 = arith.constant 0 : index
    %11 = vector.load %arg2[%c0, %c0_2] : memref<8x32xf32, #tpu.memory_space<vmem>>, vector<8x32xf32>
    %c0_3 = arith.constant 0 : index
    %c0_4 = arith.constant 0 : index
    %12 = vector.load %arg3[%c0_3, %c0_4] : memref<8x32xf32, #tpu.memory_space<vmem>>, vector<8x32xf32>
    %13 = arith.subf %11, %12 : vector<8x32xf32>
    %cst = arith.constant 0.000000e+00 : f32
    %14 = vector.shape_cast %10 : vector<8x1xi1> to vector<8x1xi1>
    %15 = vector.broadcast %14 : vector<8x1xi1> to vector<8x32xi1>
    %16 = vector.broadcast %cst : f32 to vector<8x32xf32>
    %17 = arith.select %15, %13, %16 : vector<8x32xi1>, vector<8x32xf32>
    %c0_5 = arith.constant 0 : index
    %c0_6 = arith.constant 0 : index
    %18 = vector.load %arg5[%c0_5, %c0_6] : memref<8x32xf32, #tpu.memory_space<vmem>>, vector<8x32xf32>
    %19 = arith.mulf %17, %17 : vector<8x32xf32>
    %20 = arith.addf %18, %19 : vector<8x32xf32>
    %c0_7 = arith.constant 0 : index
    %c0_8 = arith.constant 0 : index
    %21 = vector.load %arg5[%c0_7, %c0_8] : memref<8x32xf32, #tpu.memory_space<vmem>>, vector<8x32xf32>
    tpu.vector_store %arg5[%c0_7, %c0_8], %20 {strides = array<i32>} : memref<8x32xf32, #tpu.memory_space<vmem>>, vector<8x32xf32>,
    %c0_i32_9 = arith.constant 0 : i32
    %22 = arith.cmpi eq, %arg1, %c0_i32_9 : i32
    %23 = arith.extui %22 : i1 to i32
    %c0_i32_10 = arith.constant 0 : i32
    %24 = arith.cmpi ne, %23, %c0_i32_10 : i32
    scf.if %24 {
      %c0_11 = arith.constant 0 : index
      %c0_12 = arith.constant 0 : index
      %25 = vector.load %arg5[%c0_11, %c0_12] : memref<8x32xf32, #tpu.memory_space<vmem>>, vector<8x32xf32>
      %26 = vector.shape_cast %25 : vector<8x32xf32> to vector<1x8x32xf32>
      %cst_13 = arith.constant dense<0.000000e+00> : vector<1xf32>
      %27 = vector.multi_reduction <add>, %26, %cst_13 [1, 2] : vector<1x8x32xf32> to vector<1xf32>
      %28 = vector.shape_cast %27 : vector<1xf32> to vector<1x1x1xf32>
      %29 = vector.extract %28[0, 0, 0] : f32 from vector<1x1x1xf32>
      %30 = vector.broadcast %29 : f32 to vector<1x8x128xf32>
      %c0_14 = arith.constant 0 : index
      %c0_15 = arith.constant 0 : index
      %c0_16 = arith.constant 0 : index
      %31 = vector.load %arg4[%c0_14, %c0_15, %c0_16] : memref<1x8x128xf32, #tpu.memory_space<vmem>>, vector<1x8x128xf32>
      tpu.vector_store %arg4[%c0_14, %c0_15, %c0_16], %30 {strides = array<i32>} : memref<1x8x128xf32, #tpu.memory_space<vmem>>, vector<1x8x128xf32>,
    } else {
    }
    return
  }
  func.func @transform_0(%arg0: i32, %arg1: i32) -> (i32, i32) {
    %c1_i32 = arith.constant 1 : i32
    %0 = arith.muli %arg0, %c1_i32 : i32
    %1 = arith.addi %0, %arg1 : i32
    %c0_i32 = arith.constant 0 : i32
    %2 = arith.minsi %1, %c0_i32 : i32
    %c0_i32_0 = arith.constant 0 : i32
    %c0_i32_1 = arith.constant 0 : i32
    return %2, %c0_i32_0 : i32, i32
  }
  func.func @transform_1(%arg0: i32, %arg1: i32) -> (i32, i32) {
    %c1_i32 = arith.constant 1 : i32
    %0 = arith.muli %arg0, %c1_i32 : i32
    %1 = arith.addi %0, %arg1 : i32
    %c0_i32 = arith.constant 0 : i32
    %2 = arith.minsi %1, %c0_i32 : i32
    %c0_i32_0 = arith.constant 0 : i32
    %c0_i32_1 = arith.constant 0 : i32
    return %2, %c0_i32_0 : i32, i32
  }
  func.func @transform_2(%arg0: i32, %arg1: i32) -> (i32, i32, i32) {
    %c0_i32 = arith.constant 0 : i32
    %c0_i32_0 = arith.constant 0 : i32
    %c0_i32_1 = arith.constant 0 : i32
    return %arg0, %c0_i32, %c0_i32_0 : i32, i32, i32
  }
}

</mosaic_0001>

<llo_original>
// kernel: tpu_custom_call.1
$region0: #{tpu_custom_call.1}
  #allocation0 [shape = 'u32[]', space=smem, size = 0x4, offset = 0x4, fixed_abs, tag = 'smem constant byte address 0x4 - core index']
  #allocation1 [shape = 'u32[144,128]{1,0:T(1,128)}', space=vmem, size = 0x12000, scoped, tag = 'internal scratch']
  #allocation2 [shape = 'f32[8,32]{1,0:T(8,128)}', space=vmem, size = 0x1000, scoped, tag = 'scratch operand']
  %s0 = inlined_call_operand.hbm [shape: f32[8,32], index: 0, kind: input, shape index: {}]
  %s1 = inlined_call_operand.hbm [shape: f32[8,32], index: 1, kind: input, shape index: {}]
  %s2 = inlined_call_operand.hbm [shape: f32[1,8,128], index: 2, kind: output, shape index: {}]
  %s3 = sld [smem:[#allocation0]]
  $region34: #{tpu_custom_call.1} parent=0
    _
  %s5 = ssub.s32 1, %s3
  %s6 = scalar_select 0, %s5, %s3
  $region1: #{tpu_custom_call.1} parent=0
    #allocation3 [shape = 'u8[4096]{0}', space=vmem, size = 0x1000, scoped, tag = 'input window, operand 0, single buffered']
    #allocation4 [shape = 's32[1]{0}', space=sflag, size = 0x4, scoped, tag = 'scoped memory for tpu_custom_call.1']
    #allocation5 [shape = 's32[1]{0}', space=sflag, size = 0x4, scoped, tag = 'scoped memory for tpu_custom_call.1']
    #allocation6 [shape = 'u8[4096]{0}', space=vmem, size = 0x1000, scoped, tag = 'input window, operand 1, single buffered']
    #allocation7 [shape = 's32[1]{0}', space=sflag, size = 0x4, scoped, tag = 'scoped memory for tpu_custom_call.1']
    #allocation8 [shape = 'u8[4096]{0}', space=vmem, size = 0x1000, scoped, tag = 'output window, operand 0, single buffered']
    %7 = vsyncpa [#allocation4], 0
    %8 = vsyncpa [#allocation7], 0
    %9 = vsyncpa [#allocation5], 0
    // Predicated region
    $region2: #{tpu_custom_call.1} parent=1 // pred_check
      _
    $region3: #{tpu_custom_call.1} parent=1 // pred_check_branch
      %11 = sbr.rel (0) target = $region5
    $region4: #{tpu_custom_call.1} parent=1 // pred_region
      %s12 = sadd.s32 0, 0
      %p13 = scmp.lt.s32.totalorder %s12, 0
      %s14 = scalar_select %p13, %s12, 0
      %s16 = ssub.s32 128, 128
      %17 = vsyncadd [#allocation4], %s16
      %s18 = smul.addr %s14, 128
      %s19 = scalar_lea.hbm %s0, %s18
      %s21 = sshll.u32 [#allocation3], 4
      %s22 = int_to_ptr.vmem [resolvable:$true] %s21
      %24 = dma.hbm_to_vmem [thread:$0]  %s19, 128, %s22, [#allocation4]
    $region5: #{tpu_custom_call.1} parent=1 // pred_fallthru
      _
    // Predicated region
    $region6: #{tpu_custom_call.1} parent=1 // pred_check
      _
    $region7: #{tpu_custom_call.1} parent=1 // pred_check_branch
      %26 = sbr.rel (0) target = $region9
    $region8: #{tpu_custom_call.1} parent=1 // pred_region
      %s27 = sadd.s32 0, 0
      %p28 = scmp.lt.s32.totalorder %s27, 0
      %s29 = scalar_select %p28, %s27, 0
      %s31 = ssub.s32 128, 128
      %32 = vsyncadd [#allocation7], %s31
      %s33 = smul.addr %s29, 128
      %s34 = scalar_lea.hbm %s1, %s33
      %s36 = sshll.u32 [#allocation6], 4
      %s37 = int_to_ptr.vmem [resolvable:$true] %s36
      %39 = dma.hbm_to_vmem [thread:$0]  %s34, 128, %s37, [#allocation7]
    $region9: #{tpu_custom_call.1} parent=1 // pred_fallthru
      _
    // Predicated region
    $region10: #{tpu_custom_call.1} parent=1 // pred_check
      _
    $region11: #{tpu_custom_call.1} parent=1 // pred_check_branch
      %41 = sbr.rel (0) target = $region13
    $region12: #{tpu_custom_call.1} parent=1 // pred_region
      %42 = dma.done [#allocation4], 128
    $region13: #{tpu_custom_call.1} parent=1 // pred_fallthru
      _
    // Predicated region
    $region14: #{tpu_custom_call.1} parent=1 // pred_check
      _
    $region15: #{tpu_custom_call.1} parent=1 // pred_check_branch
      %44 = sbr.rel (0) target = $region17
    $region16: #{tpu_custom_call.1} parent=1 // pred_region
      %45 = dma.done [#allocation7], 128
    $region17: #{tpu_custom_call.1} parent=1 // pred_fallthru
      _
    %s46 = sadd.s32 0, 0
    %p47 = scmp.lt.s32.totalorder %s46, 0
    %s48 = scalar_select %p47, %s46, 0
    %s49 = sadd.s32 0, 0
    %p50 = scmp.lt.s32.totalorder %s49, 0
    %s51 = scalar_select %p50, %s49, 0
    %p52 = scmp.eq.s32.totalorder 0, 0
    // Predicated region
    $region18: #{tpu_custom_call.1} parent=1 // pred_check
      %p53 = pneg %p52
    $region19: #{tpu_custom_call.1} parent=1 // pred_check_branch
      %55 = sbr.rel (%p53) target = $region21
    $region20: #{tpu_custom_call.1} parent=1 // pred_region
      %vm56 = vcmask 261120
      %57 = vst.msk [vmem:[#allocation2] sm:$0xff] %vm56, 0.0
    $region21: #{tpu_custom_call.1} parent=1 // pred_fallthru
      _
    %s58 = sadd.s32 0, 0
    %s59 = smul.u32 %s58, 8
    %v60 = vlaneseq
    %v61 = vshrl.u32 %v60, 7
    %v62 = vstv %s59
    %v63 = vadd.s32 %v61, %v62
    %vm64 = vcmp.lt.s32.totalorder %v63, 8
    %v65 = vld [vmem:[#allocation3] sm:$0xff]
    %v66 = vld [vmem:[#allocation6] sm:$0xff]
    %v67 = vsub.f32 %v65, %v66
    %v68 = vsel %vm64, 1, 0
    %vm69 = vcmp.eq.s32.totalorder %v68, 1
    %v70 = vsel %vm69, %v67, 0.0
    %v71 = vld [vmem:[#allocation2] sm:$0xff]
    %v72 = vmul.f32 %v70, %v70
    %v73 = vadd.f32 %v71, %v72
    %vm74 = vcmask 261120
    %75 = vst.msk [vmem:[#allocation2] sm:$0xff] %vm74, %v73
    // Predicated region
    $region22: #{tpu_custom_call.1} parent=1 // pred_check
      %p76 = pneg %p52
    $region23: #{tpu_custom_call.1} parent=1 // pred_check_branch
      %78 = sbr.rel (%p76) target = $region25
    $region24: #{tpu_custom_call.1} parent=1 // pred_region
      %v79 = vld [vmem:[#allocation2] sm:$0xff]
      %v80 = vsel %vm74, %v79, 0.0
      %81 = vadd.xlane.f32.xlu0 %v80
      %v82 = vpop.xlane.xlu0 %81
      %v83 = vrot.slane %v82, 4
      %v84 = vadd.f32 %v82, %v83
      %v85 = vrot.slane %v84, 2
      %v86 = vadd.f32 %v84, %v85
      %v87 = vrot.slane %v86, 1
      %v88 = vadd.f32 %v86, %v87
      %s89 = vtos %v88
      %v90 = vstv %s89
      %91 = vst [vmem:[#allocation8] sm:$0xff] %v90
    $region25: #{tpu_custom_call.1} parent=1 // pred_fallthru
      _
    // Predicated region
    $region26: #{tpu_custom_call.1} parent=1 // pred_check
      _
    $region27: #{tpu_custom_call.1} parent=1 // pred_check_branch
      %93 = sbr.rel (0) target = $region29
    $region28: #{tpu_custom_call.1} parent=1 // pred_region
      %s95 = ssub.s32 128, 128
      %96 = vsyncadd [#allocation5], %s95
      %s98 = sshll.u32 [#allocation8], 4
      %s99 = int_to_ptr.vmem [resolvable:$true] %s98
      %101 = dma.vmem_to_hbm [thread:$0]  %s99, 128, %s2, [#allocation5]
    $region29: #{tpu_custom_call.1} parent=1 // pred_fallthru
      _
    // Predicated region
    $region30: #{tpu_custom_call.1} parent=1 // pred_check
      _
    $region31: #{tpu_custom_call.1} parent=1 // pred_check_branch
      %103 = sbr.rel (0) target = $region33
    $region32: #{tpu_custom_call.1} parent=1 // pred_region
      %104 = dma.done [#allocation5], 128
    $region33: #{tpu_custom_call.1} parent=1 // pred_fallthru
      _
    %105 = vsyncpa [#allocation4], 1
    %106 = vsyncpa [#allocation7], 1
    %107 = vsyncpa [#allocation5], 1

</llo_original>
